<compile_context>
chip_gen: v5e
topology: v5e:2x2
jax: 0.10.0
libtpu: 0.0.40
codegen_flags: <defaults>
</compile_context>

<pallas_src>
import functools

import jax
import jax.numpy as jnp
from jax.experimental import pallas as pl
from jax.experimental.pallas import tpu as pltpu


def _cdiv(a, b):
    return -(-a // b)


def _round_up(x, m):
    return (x + m - 1) // m * m


def _erf(x):
    # Abramowitz & Stegun 7.1.26 rational approximation (|err| < 1.5e-7),
    # built only from ops with guaranteed Mosaic lowerings.
    a1, a2, a3, a4, a5 = (0.254829592, -0.284496736, 1.421413741,
                          -1.453152027, 1.061405429)
    p = 0.3275911
    ax = jnp.abs(x)
    d = 1.0 + p * ax
    t = pl.reciprocal(d, approx=True)      # EUP slot (free vs VALU)
    t = t * (2.0 - d * t)                  # one Newton step -> ~f32-exact 1/d
    poly = ((((a5 * t + a4) * t + a3) * t + a2) * t + a1) * t
    y = 1.0 - poly * jnp.exp(-(ax * ax))
    return jnp.where(x >= 0.0, y, -y)


def _gelu_exact(x):
    # Exact (erf-based) GELU, matching torch.nn.functional.gelu / ACT2FN["gelu"].
    # TODO(synk): when the output dtype is bf16, the polynomial could run in
    # bf16 (2x VALU throughput on v6e/v7x); kept f32 here for accuracy.
    return 0.5 * x * (1.0 + _erf(x * 0.7071067811865476))


def _pairwise_intermediate_kernel(x_ref, g_ref, bln_ref, w_ref, b_ref, o_ref, *, eps):
    # x_ref:   (tm, P)  tile of flattened hidden_states (streamed)
    # g_ref:   (1,  P)  LayerNorm gamma, f32 (resident)
    # bln_ref: (1,  P)  LayerNorm beta,  f32 (resident)
    # w_ref:   (P,  I)  dense weight pre-transposed to in x out, f32 (resident)
    # b_ref:   (1,  I)  dense bias, f32 (resident)
    # o_ref:   (tm, I)  output tile (streamed, lane-dense when I >= 128)
    x = x_ref[...].astype(jnp.float32)
    mean = jnp.mean(x, axis=-1, keepdims=True)
    xc = x - mean
    var = jnp.mean(xc * xc, axis=-1, keepdims=True)
    ln = xc * jax.lax.rsqrt(var + eps)
    ln = ln * g_ref[...] + bln_ref[...]
    z = jnp.dot(ln, w_ref[...], preferred_element_type=jnp.float32)
    z = z + b_ref[...]
    o_ref[...] = _gelu_exact(z).astype(o_ref.dtype)


def _vmem_limit_bytes():
    try:
        cap = int(pltpu.get_tpu_info().vmem_capacity_bytes)
    except Exception:
        cap = 64 * 1024 * 1024  # conservative (v7x-sized) fallback
    # ~56 MiB on 128-MiB parts (v5e/v6e), ~38 MiB on v7x's 64-MiB VMEM.
    return min(int(cap * 0.6), 56 * 1024 * 1024)


def pairwise_intermediate(hidden_states, ln_weight, ln_bias,
                          dense_weight, dense_bias, *, eps=1e-12, tm=None):
    """hidden_states: (B, L, L, P); dense_weight: (I, P); returns (B, L, L, I)."""
    B, L1, L2, P = hidden_states.shape
    I = dense_weight.shape[0]
    assert dense_weight.shape == (I, P)
    assert ln_weight.shape == (P,) and ln_bias.shape == (P,)
    assert dense_bias.shape == (I,)

    M = B * L1 * L2
    in_item = jnp.dtype(hidden_states.dtype).itemsize
    out_item = in_item

    vmem_limit = _vmem_limit_bytes()

    # Resident operands (W^T, gamma, beta, bias), all f32 in VMEM.
    resident_bytes = (P * I + 2 * P + I) * 4
    # Per-row VMEM footprint: double-buffered x/out DMA tiles plus f32
    # intermediates (x, ln on the P side; z + GELU temps on the I side).
    row_bytes = 2 * (P * in_item + I * out_item) + (2 * P + 3 * I) * 4
    tile_budget = int(vmem_limit * 0.85) - 2 * resident_bytes
    tm_max = max(8, (tile_budget // row_bytes) // 8 * 8)
    if tm is not None:
        tm_max = max(8, min(tm_max, _round_up(tm, 8)))

    # Balanced tiles over an unpadded (ragged) grid; >= 2 steps so the
    # "parallel" axis can shard across both TensorCores on v7x.
    min_steps = 2 if M > 8 else 1
    steps = max(min_steps, _cdiv(M, tm_max))
    tm_rows = min(_round_up(_cdiv(M, steps), 8), _round_up(M, 8))
    grid = (_cdiv(M, tm_rows),)

    x2d = hidden_states.reshape(M, P)          # free reshape, no pad / copy
    w_t = dense_weight.T.astype(jnp.float32)   # (P, I): kernel does ln @ w_t
    g2d = ln_weight.reshape(1, P).astype(jnp.float32)
    bln2d = ln_bias.reshape(1, P).astype(jnp.float32)
    b2d = dense_bias.reshape(1, I).astype(jnp.float32)

    cost = pl.CostEstimate(
        flops=int(2 * M * P * I + 10 * M * P + 30 * M * I),
        transcendentals=int(2 * M * I + M),     # exp + rcp (GELU), rsqrt (LN)
        bytes_accessed=int(M * P * in_item + M * I * out_item + resident_bytes),
    )

    # NOTE: the four resident inputs could use pipeline_mode=pl.Buffered(1)
    # (constant index_map) to halve their VMEM copies; omitted since they are
    # tiny here and single-buffering support varies across JAX versions.
    out2d = pl.pallas_call(
        functools.partial(_pairwise_intermediate_kernel, eps=float(eps)),
        out_shape=jax.ShapeDtypeStruct((M, I), hidden_states.dtype),
        grid_spec=pltpu.PrefetchScalarGridSpec(
            num_scalar_prefetch=0,
            grid=grid,
            in_specs=[
                pl.BlockSpec((tm_rows, P), lambda i: (i, 0)),   # x (streamed)
                pl.BlockSpec((1, P), lambda i: (0, 0)),         # LN gamma
                pl.BlockSpec((1, P), lambda i: (0, 0)),         # LN beta
                pl.BlockSpec((P, I), lambda i: (0, 0)),         # dense W^T
                pl.BlockSpec((1, I), lambda i: (0, 0)),         # dense bias
            ],
            out_specs=pl.BlockSpec((tm_rows, I), lambda i: (i, 0)),
        ),
        compiler_params=pltpu.CompilerParams(
            dimension_semantics=("parallel",),
            vmem_limit_bytes=int(vmem_limit),
        ),
        cost_estimate=cost,
    )(x2d, g2d, bln2d, w_t, b2d)

    return out2d.reshape(B, L1, L2, I)


# TODO(synk): activation is hard-coded to exact GELU (ACT2FN["gelu"], the
# RibonanzaNet default for pairwise_hidden_act); other config activations would
# need the corresponding elementwise epilogue swapped in.


if __name__ == "__main__":
    # Small shapes consistent with the module: pairwise tensor (B, L, L, pairwise_size),
    # pairwise_intermediate_size = 128 (lane-dense output).
    B, L, P, I = 2, 8, 32, 128
    eps = 1e-12  # RibonanzaNet config layer_norm_eps (HF-style default)

    key = jax.random.PRNGKey(0)
    k_x, k_g, k_b, k_w, k_d = jax.random.split(key, 5)

    hidden_states = jax.random.normal(k_x, (B, L, L, P), dtype=jnp.float32)
    ln_weight = 1.0 + 0.1 * jax.random.normal(k_g, (P,), dtype=jnp.float32)
    ln_bias = 0.1 * jax.random.normal(k_b, (P,), dtype=jnp.float32)

    bound = 1.0 / (P ** 0.5)
    dense_weight = jax.random.uniform(k_w, (I, P), minval=-bound, maxval=bound,
                                      dtype=jnp.float32)
    dense_bias = jax.random.uniform(k_d, (I,), minval=-bound, maxval=bound,
                                    dtype=jnp.float32)

    out = pairwise_intermediate(hidden_states, ln_weight, ln_bias,
                                dense_weight, dense_bias, eps=eps)
    jax.block_until_ready(out)

    # Pure-JAX reference: LayerNorm -> Linear -> exact (erf) GELU.
    mean = hidden_states.mean(-1, keepdims=True)
    var = jnp.mean((hidden_states - mean) ** 2, axis=-1, keepdims=True)
    ln = (hidden_states - mean) / jnp.sqrt(var + eps) * ln_weight + ln_bias
    ref = jax.nn.gelu(jnp.einsum("blmp,qp->blmq", ln, dense_weight) + dense_bias,
                      approximate=False)

    assert out.shape == ref.shape
    err = float(jnp.max(jnp.abs(out - ref)))
    assert jnp.allclose(out, ref, atol=2e-4, rtol=2e-4), \
        f"mismatch vs reference (max abs err {err})"

    print("KERNEL_OK")
</pallas_src>

<mosaic_0001>
module attributes {stable_mosaic.version = 11 : i64} {
  func.func @_pairwise_intermediate_kernel(%arg0: i32, %arg1: memref<64x32xf32, #tpu.memory_space<vmem>>, %arg2: memref<1x32xf32, #tpu.memory_space<vmem>>, %arg3: memref<1x32xf32, #tpu.memory_space<vmem>>, %arg4: memref<32x128xf32, #tpu.memory_space<vmem>>, %arg5: memref<1x128xf32, #tpu.memory_space<vmem>>, %arg6: memref<64x128xf32, #tpu.memory_space<vmem>>) attributes {dimension_semantics = [#tpu.dimension_semantics<parallel>], iteration_bounds = array<i64: 2>, scalar_prefetch = 0 : i64, scratch_operands = 0 : i64, tpu.core_type = #tpu.core_type<tc>, window_params = [{transform_indices = @transform_0, window_bounds = array<i64: 64, 32>}, {pipeline_mode = #tpu.pipeline_mode<synchronous>, transform_indices = @transform_1, window_bounds = array<i64: 1, 32>}, {pipeline_mode = #tpu.pipeline_mode<synchronous>, transform_indices = @transform_2, window_bounds = array<i64: 1, 32>}, {pipeline_mode = #tpu.pipeline_mode<synchronous>, transform_indices = @transform_3, window_bounds = array<i64: 32, 128>}, {pipeline_mode = #tpu.pipeline_mode<synchronous>, transform_indices = @transform_4, window_bounds = array<i64: 1, 128>}, {transform_indices = @transform_5, window_bounds = array<i64: 64, 128>}]} {
    %c0 = arith.constant 0 : index
    %c0_0 = arith.constant 0 : index
    %0 = vector.load %arg1[%c0, %c0_0] : memref<64x32xf32, #tpu.memory_space<vmem>>, vector<64x32xf32>
    %cst = arith.constant dense<0.000000e+00> : vector<64xf32>
    %1 = vector.multi_reduction <add>, %0, %cst [1] : vector<64x32xf32> to vector<64xf32>
    %2 = vector.shape_cast %1 : vector<64xf32> to vector<64x1xf32>
    %cst_1 = arith.constant 3.200000e+01 : f32
    %3 = vector.broadcast %cst_1 : f32 to vector<64x1xf32>
    %4 = arith.divf %2, %3 : vector<64x1xf32>
    %5 = vector.broadcast %4 : vector<64x1xf32> to vector<64x32xf32>
    %6 = arith.subf %0, %5 : vector<64x32xf32>
    %7 = arith.mulf %6, %6 : vector<64x32xf32>
    %cst_2 = arith.constant dense<0.000000e+00> : vector<64xf32>
    %8 = vector.multi_reduction <add>, %7, %cst_2 [1] : vector<64x32xf32> to vector<64xf32>
    %9 = vector.shape_cast %8 : vector<64xf32> to vector<64x1xf32>
    %cst_3 = arith.constant 3.200000e+01 : f32
    %10 = vector.broadcast %cst_3 : f32 to vector<64x1xf32>
    %11 = arith.divf %9, %10 : vector<64x1xf32>
    %cst_4 = arith.constant 9.99999996E-13 : f32
    %12 = vector.broadcast %cst_4 : f32 to vector<64x1xf32>
    %13 = arith.addf %11, %12 : vector<64x1xf32>
    %14 = math.rsqrt %13 : vector<64x1xf32>
    %15 = vector.broadcast %14 : vector<64x1xf32> to vector<64x32xf32>
    %16 = arith.mulf %6, %15 : vector<64x32xf32>
    %c0_5 = arith.constant 0 : index
    %c0_6 = arith.constant 0 : index
    %17 = vector.load %arg2[%c0_5, %c0_6] : memref<1x32xf32, #tpu.memory_space<vmem>>, vector<1x32xf32>
    %18 = vector.broadcast %17 : vector<1x32xf32> to vector<64x32xf32>
    %19 = arith.mulf %16, %18 : vector<64x32xf32>
    %c0_7 = arith.constant 0 : index
    %c0_8 = arith.constant 0 : index
    %20 = vector.load %arg3[%c0_7, %c0_8] : memref<1x32xf32, #tpu.memory_space<vmem>>, vector<1x32xf32>
    %21 = vector.broadcast %20 : vector<1x32xf32> to vector<64x32xf32>
    %22 = arith.addf %19, %21 : vector<64x32xf32>
    %c0_9 = arith.constant 0 : index
    %c0_10 = arith.constant 0 : index
    %23 = vector.load %arg4[%c0_9, %c0_10] : memref<32x128xf32, #tpu.memory_space<vmem>>, vector<32x128xf32>
    %cst_11 = arith.constant dense<0.000000e+00> : vector<64x128xf32>
    %24 = tpu.matmul %22, %23, %cst_11 {dimension_numbers = #tpu.dot_dimension_numbers<[1], [0], [0], [1], [0, 0, 1, 1], [], []>} : vector<64x32xf32>, vector<32x128xf32>, vector<64x128xf32> -> vector<64x128xf32>
    %c0_12 = arith.constant 0 : index
    %c0_13 = arith.constant 0 : index
    %25 = vector.load %arg5[%c0_12, %c0_13] : memref<1x128xf32, #tpu.memory_space<vmem>>, vector<1x128xf32>
    %26 = vector.broadcast %25 : vector<1x128xf32> to vector<64x128xf32>
    %27 = arith.addf %24, %26 : vector<64x128xf32>
    %cst_14 = arith.constant 5.000000e-01 : f32
    %28 = vector.broadcast %cst_14 : f32 to vector<64x128xf32>
    %29 = arith.mulf %28, %27 : vector<64x128xf32>
    %cst_15 = arith.constant 0.707106769 : f32
    %30 = vector.broadcast %cst_15 : f32 to vector<64x128xf32>
    %31 = arith.mulf %27, %30 : vector<64x128xf32>
    %32 = math.absf %31 : vector<64x128xf32>
    %cst_16 = arith.constant 0.327591091 : f32
    %33 = vector.broadcast %cst_16 : f32 to vector<64x128xf32>
    %34 = arith.mulf %33, %32 : vector<64x128xf32>
    %cst_17 = arith.constant 1.000000e+00 : f32
    %35 = vector.broadcast %cst_17 : f32 to vector<64x128xf32>
    %36 = arith.addf %35, %34 : vector<64x128xf32>
    %37 = tpu.reciprocal %36 {approx = true} : vector<64x128xf32> -> vector<64x128xf32>
    %38 = arith.mulf %36, %37 : vector<64x128xf32>
    %cst_18 = arith.constant 2.000000e+00 : f32
    %39 = vector.broadcast %cst_18 : f32 to vector<64x128xf32>
    %40 = arith.subf %39, %38 : vector<64x128xf32>
    %41 = arith.mulf %37, %40 : vector<64x128xf32>
    %cst_19 = arith.constant 1.06140542 : f32
    %42 = vector.broadcast %cst_19 : f32 to vector<64x128xf32>
    %43 = arith.mulf %42, %41 : vector<64x128xf32>
    %cst_20 = arith.constant -1.45315206 : f32
    %44 = vector.broadcast %cst_20 : f32 to vector<64x128xf32>
    %45 = arith.addf %43, %44 : vector<64x128xf32>
    %46 = arith.mulf %45, %41 : vector<64x128xf32>
    %cst_21 = arith.constant 1.42141378 : f32
    %47 = vector.broadcast %cst_21 : f32 to vector<64x128xf32>
    %48 = arith.addf %46, %47 : vector<64x128xf32>
    %49 = arith.mulf %48, %41 : vector<64x128xf32>
    %cst_22 = arith.constant -0.284496725 : f32
    %50 = vector.broadcast %cst_22 : f32 to vector<64x128xf32>
    %51 = arith.addf %49, %50 : vector<64x128xf32>
    %52 = arith.mulf %51, %41 : vector<64x128xf32>
    %cst_23 = arith.constant 0.254829586 : f32
    %53 = vector.broadcast %cst_23 : f32 to vector<64x128xf32>
    %54 = arith.addf %52, %53 : vector<64x128xf32>
    %55 = arith.mulf %54, %41 : vector<64x128xf32>
    %56 = arith.mulf %32, %32 : vector<64x128xf32>
    %cst_24 = arith.constant 0.000000e+00 : f32
    %57 = vector.broadcast %cst_24 : f32 to vector<64x128xf32>
    %58 = arith.subf %57, %56 : vector<64x128xf32>
    %59 = math.exp %58 : vector<64x128xf32>
    %60 = arith.mulf %55, %59 : vector<64x128xf32>
    %cst_25 = arith.constant 1.000000e+00 : f32
    %61 = vector.broadcast %cst_25 : f32 to vector<64x128xf32>
    %62 = arith.subf %61, %60 : vector<64x128xf32>
    %cst_26 = arith.constant 0.000000e+00 : f32
    %63 = vector.broadcast %cst_26 : f32 to vector<64x128xf32>
    %64 = arith.cmpf oge, %31, %63 : vector<64x128xf32>
    %cst_27 = arith.constant 0.000000e+00 : f32
    %65 = vector.broadcast %cst_27 : f32 to vector<64x128xf32>
    %66 = arith.subf %65, %62 : vector<64x128xf32>
    %67 = arith.select %64, %62, %66 : vector<64x128xi1>, vector<64x128xf32>
    %cst_28 = arith.constant 1.000000e+00 : f32
    %68 = vector.broadcast %cst_28 : f32 to vector<64x128xf32>
    %69 = arith.addf %68, %67 : vector<64x128xf32>
    %70 = arith.mulf %29, %69 : vector<64x128xf32>
    %c0_29 = arith.constant 0 : index
    %c0_30 = arith.constant 0 : index
    %71 = vector.load %arg6[%c0_29, %c0_30] : memref<64x128xf32, #tpu.memory_space<vmem>>, vector<64x128xf32>
    tpu.vector_store %arg6[%c0_29, %c0_30], %70 {strides = array<i32>} : memref<64x128xf32, #tpu.memory_space<vmem>>, vector<64x128xf32>,
    return
  }
  func.func @transform_0(%arg0: i32) -> (i32, i32) {
    %c0_i32 = arith.constant 0 : i32
    %c0_i32_0 = arith.constant 0 : i32
    return %arg0, %c0_i32 : i32, i32
  }
  func.func @transform_1(%arg0: i32) -> (i32, i32) {
    %c0_i32 = arith.constant 0 : i32
    %c0_i32_0 = arith.constant 0 : i32
    %c0_i32_1 = arith.constant 0 : i32
    return %c0_i32, %c0_i32_0 : i32, i32
  }
  func.func @transform_2(%arg0: i32) -> (i32, i32) {
    %c0_i32 = arith.constant 0 : i32
    %c0_i32_0 = arith.constant 0 : i32
    %c0_i32_1 = arith.constant 0 : i32
    return %c0_i32, %c0_i32_0 : i32, i32
  }
  func.func @transform_3(%arg0: i32) -> (i32, i32) {
    %c0_i32 = arith.constant 0 : i32
    %c0_i32_0 = arith.constant 0 : i32
    %c0_i32_1 = arith.constant 0 : i32
    return %c0_i32, %c0_i32_0 : i32, i32
  }
  func.func @transform_4(%arg0: i32) -> (i32, i32) {
    %c0_i32 = arith.constant 0 : i32
    %c0_i32_0 = arith.constant 0 : i32
    %c0_i32_1 = arith.constant 0 : i32
    return %c0_i32, %c0_i32_0 : i32, i32
  }
  func.func @transform_5(%arg0: i32) -> (i32, i32) {
    %c0_i32 = arith.constant 0 : i32
    %c0_i32_0 = arith.constant 0 : i32
    return %arg0, %c0_i32 : i32, i32
  }
}

</mosaic_0001>

<llo_original>
// kernel: tpu_custom_call.1
$region0: #{tpu_custom_call.1}
  #allocation0 [shape = 'u32[]', space=smem, size = 0x4, offset = 0x4, fixed_abs, tag = 'smem constant byte address 0x4 - core index']
  #allocation1 [shape = 'u32[72,128]{1,0:T(1,128)}', space=vmem, size = 0x9000, scoped, tag = 'internal scratch']
  %s0 = inlined_call_operand.vmem [shape: f32[128,32], index: 0, kind: input, shape index: {}]
  %s1 = inlined_call_operand.vmem [shape: f32[1,32], index: 1, kind: input, shape index: {}]
  %s2 = inlined_call_operand.vmem [shape: f32[1,32], index: 2, kind: input, shape index: {}]
  %s3 = inlined_call_operand.vmem [shape: f32[32,128], index: 3, kind: input, shape index: {}]
  %s4 = inlined_call_operand.vmem [shape: f32[1,128], index: 4, kind: input, shape index: {}]
  %s5 = inlined_call_operand.hbm [shape: f32[128,128], index: 5, kind: output, shape index: {}]
  %s6 = sld [smem:[#allocation0]]
  $region53: #{tpu_custom_call.1} parent=0
    _
  %s8 = ssub.s32 1, %s6
  %s9 = scalar_select 0, %s8, %s6
  $region1: #{tpu_custom_call.1} parent=0
    #allocation2 [shape = 'u8[65536]{0}', space=vmem, size = 0x10000, scoped, tag = 'output window, operand 0']
    #allocation3 [shape = 's32[2]{0}', space=sflag, size = 0x8, scoped, tag = 'scoped memory for tpu_custom_call.1']
    %10 = vsyncpa [#allocation3], 0
    %s11 = scalar_lea.sflag [#allocation3], 1
    %12 = vsyncpa %s11, 0
    loop: start=0, step=1, limit=4
    $region2: #{tpu_custom_call.1} parent=1 // loop_pre_header
      _
    $region3: #{tpu_custom_call.1} parent=1 // loop_header
      %s14 = sphi 0, %s18
      %p15 = scmp.ge.s32.totalorder %s14, 4
      %s24 = sphi 0, %s26
      %s27 = sphi 0, %s24
      %s28 = sphi 0, %s27
      %s44 = sphi 0, %s28
      %s48 = sphi 0, %s48
      %s50 = sphi 0, %s48
      %s51 = sphi 0, %s50
      %s65 = sphi 0, %s51
      %s69 = sphi 0, %s69
      %s71 = sphi 0, %s69
      %s72 = sphi 0, %s71
      %s86 = sphi 0, %s72
      %s90 = sphi 0, %s90
      %s92 = sphi 0, %s90
      %s93 = sphi 0, %s92
      %s107 = sphi 0, %s93
      %s111 = sphi 0, %s111
      %s113 = sphi 0, %s111
      %s114 = sphi 0, %s113
      %s128 = sphi 0, %s114
      %s134 = sphi 0, %s136
      %s137 = sphi 0, %s134
      %s138 = sphi 0, %s137
      %s154 = sphi 0, %s138
    $region4: #{tpu_custom_call.1} parent=1 // loop_header_branch
      %17 = sbr.rel (%p15) target = $region8
    $region5: #{tpu_custom_call.1} parent=1 // loop_body
      %s19 = ssub.s32 %s14, 1
      %s20 = ssub.s32 %s14, 2
      %s21 = sadd.s32 %s14, 1
      %s22 = ssub.s32 %s14, %s21
      %p23 = scmp.eq.s32.totalorder %s22, 0
      %s25 = sadd.s32 %s24, 1
      %s26 = scalar_select %p23, %s24, %s25
      %p29 = pneg %p23
      %p30 = scmp.eq.s32.totalorder %s14, 1
      %p31 = por %p29, %p30
      %p32 = scmp.ne.s32.totalorder %s24, %s27
      %p33 = scmp.eq.s32.totalorder %s14, 0
      %p34 = por %p32, %p33
      %p35 = scmp.ne.s32.totalorder %s24, %s27
      %p36 = scmp.eq.s32.totalorder %s19, 1
      %p37 = por %p35, %p36
      %p38 = scmp.ne.s32.totalorder %s27, %s28
      %p39 = scmp.eq.s32.totalorder %s19, 0
      %p40 = por %p38, %p39
      %p41 = scmp.ne.s32.totalorder %s27, %s28
      %p42 = scmp.eq.s32.totalorder %s20, 1
      %p43 = por %p41, %p42
      %p45 = scmp.ne.s32.totalorder %s28, %s44
      %p46 = scmp.eq.s32.totalorder %s20, 0
      %p47 = por %p45, %p46
      %s49 = sadd.s32 %s48, 1
      %p52 = scmp.eq.s32.totalorder %s14, 1
      %p53 = scmp.ne.s32.totalorder %s48, %s50
      %p54 = scmp.eq.s32.totalorder %s14, 0
      %p55 = por %p53, %p54
      %p56 = scmp.ne.s32.totalorder %s48, %s50
      %p57 = scmp.eq.s32.totalorder %s19, 1
      %p58 = por %p56, %p57
      %p59 = scmp.ne.s32.totalorder %s50, %s51
      %p60 = scmp.eq.s32.totalorder %s19, 0
      %p61 = por %p59, %p60
      %p62 = scmp.ne.s32.totalorder %s50, %s51
      %p63 = scmp.eq.s32.totalorder %s20, 1
      %p64 = por %p62, %p63
      %p66 = scmp.ne.s32.totalorder %s51, %s65
      %p67 = scmp.eq.s32.totalorder %s20, 0
      %p68 = por %p66, %p67
      %s70 = sadd.s32 %s69, 1
      %p73 = scmp.eq.s32.totalorder %s14, 1
      %p74 = scmp.ne.s32.totalorder %s69, %s71
      %p75 = scmp.eq.s32.totalorder %s14, 0
      %p76 = por %p74, %p75
      %p77 = scmp.ne.s32.totalorder %s69, %s71
      %p78 = scmp.eq.s32.totalorder %s19, 1
      %p79 = por %p77, %p78
      %p80 = scmp.ne.s32.totalorder %s71, %s72
      %p81 = scmp.eq.s32.totalorder %s19, 0
      %p82 = por %p80, %p81
      %p83 = scmp.ne.s32.totalorder %s71, %s72
      %p84 = scmp.eq.s32.totalorder %s20, 1
      %p85 = por %p83, %p84
      %p87 = scmp.ne.s32.totalorder %s72, %s86
      %p88 = scmp.eq.s32.totalorder %s20, 0
      %p89 = por %p87, %p88
      %s91 = sadd.s32 %s90, 1
      %p94 = scmp.eq.s32.totalorder %s14, 1
      %p95 = scmp.ne.s32.totalorder %s90, %s92
      %p96 = scmp.eq.s32.totalorder %s14, 0
      %p97 = por %p95, %p96
      %p98 = scmp.ne.s32.totalorder %s90, %s92
      %p99 = scmp.eq.s32.totalorder %s19, 1
      %p100 = por %p98, %p99
      %p101 = scmp.ne.s32.totalorder %s92, %s93
      %p102 = scmp.eq.s32.totalorder %s19, 0
      %p103 = por %p101, %p102
      %p104 = scmp.ne.s32.totalorder %s92, %s93
      %p105 = scmp.eq.s32.totalorder %s20, 1
      %p106 = por %p104, %p105
      %p108 = scmp.ne.s32.totalorder %s93, %s107
      %p109 = scmp.eq.s32.totalorder %s20, 0
      %p110 = por %p108, %p109
      %s112 = sadd.s32 %s111, 1
      %p115 = scmp.eq.s32.totalorder %s14, 1
      %p116 = scmp.ne.s32.totalorder %s111, %s113
      %p117 = scmp.eq.s32.totalorder %s14, 0
      %p118 = por %p116, %p117
      %p119 = scmp.ne.s32.totalorder %s111, %s113
      %p120 = scmp.eq.s32.totalorder %s19, 1
      %p121 = por %p119, %p120
      %p122 = scmp.ne.s32.totalorder %s113, %s114
      %p123 = scmp.eq.s32.totalorder %s19, 0
      %p124 = por %p122, %p123
      %p125 = scmp.ne.s32.totalorder %s113, %s114
      %p126 = scmp.eq.s32.totalorder %s20, 1
      %p127 = por %p125, %p126
      %p129 = scmp.ne.s32.totalorder %s114, %s128
      %p130 = scmp.eq.s32.totalorder %s20, 0
      %p131 = por %p129, %p130
      %s132 = ssub.s32 %s14, %s21
      %p133 = scmp.eq.s32.totalorder %s132, 0
      %s135 = sadd.s32 %s134, 1
      %s136 = scalar_select %p133, %s134, %s135
      %p139 = pneg %p133
      %p140 = scmp.eq.s32.totalorder %s14, 1
      %p141 = por %p139, %p140
      %p142 = scmp.ne.s32.totalorder %s134, %s137
      %p143 = scmp.eq.s32.totalorder %s14, 0
      %p144 = por %p142, %p143
      %p145 = scmp.ne.s32.totalorder %s134, %s137
      %p146 = scmp.eq.s32.totalorder %s19, 1
      %p147 = por %p145, %p146
      %p148 = scmp.ne.s32.totalorder %s137, %s138
      %p149 = scmp.eq.s32.totalorder %s19, 0
      %p150 = por %p148, %p149
      %p151 = scmp.ne.s32.totalorder %s137, %s138
      %p152 = scmp.eq.s32.totalorder %s20, 1
      %p153 = por %p151, %p152
      %p155 = scmp.ne.s32.totalorder %s138, %s154
      %p156 = scmp.eq.s32.totalorder %s20, 0
      %p157 = por %p155, %p156
      %p158 = scmp.le.s32.totalorder 1, %s14
      %p159 = scmp.lt.s32.totalorder %s14, 3
      %p160 = pnand %p158, %p159
      %p161 = pneg %p160
      // Predicated region
      $region9: #{tpu_custom_call.1} parent=5 // pred_check
        _
      $region10: #{tpu_custom_call.1} parent=5 // pred_check_branch
        %163 = sbr.rel (%p160) target = $region12
      $region11: #{tpu_custom_call.1} parent=5 // pred_region
        %s164 = ssub.s32 %s14, 1
        // Predicated region
        $region13: #{tpu_custom_call.1} parent=11 // pred_check
          %p165 = pneg %p61
        $region14: #{tpu_custom_call.1} parent=11 // pred_check_branch
          %167 = sbr.rel (%p165) target = $region16
        $region15: #{tpu_custom_call.1} parent=11 // pred_region
          _
        $region16: #{tpu_custom_call.1} parent=11 // pred_fallthru
          _
        // Predicated region
        $region17: #{tpu_custom_call.1} parent=11 // pred_check
          %p168 = pneg %p82
        $region18: #{tpu_custom_call.1} parent=11 // pred_check_branch
          %170 = sbr.rel (%p168) target = $region20
        $region19: #{tpu_custom_call.1} parent=11 // pred_region
          _
        $region20: #{tpu_custom_call.1} parent=11 // pred_fallthru
          _
        // Predicated region
        $region21: #{tpu_custom_call.1} parent=11 // pred_check
          %p171 = pneg %p103
        $region22: #{tpu_custom_call.1} parent=11 // pred_check_branch
          %173 = sbr.rel (%p171) target = $region24
        $region23: #{tpu_custom_call.1} parent=11 // pred_region
          _
        $region24: #{tpu_custom_call.1} parent=11 // pred_fallthru
          _
        // Predicated region
        $region25: #{tpu_custom_call.1} parent=11 // pred_check
          %p174 = pneg %p124
        $region26: #{tpu_custom_call.1} parent=11 // pred_check_branch
          %176 = sbr.rel (%p174) target = $region28
        $region27: #{tpu_custom_call.1} parent=11 // pred_region
          _
        $region28: #{tpu_custom_call.1} parent=11 // pred_fallthru
          _
      $region12: #{tpu_custom_call.1} parent=5 // pred_fallthru
        _
      %p177 = scmp.lt.s32.totalorder %s14, 2
      // Predicated region
      $region29: #{tpu_custom_call.1} parent=5 // pred_check
        %p178 = pneg %p177
      $region30: #{tpu_custom_call.1} parent=5 // pred_check_branch
        %180 = sbr.rel (%p178) target = $region32
      $region31: #{tpu_custom_call.1} parent=5 // pred_region
        // Predicated region
        $region33: #{tpu_custom_call.1} parent=31 // pred_check
          %p181 = pneg %p34
        $region34: #{tpu_custom_call.1} parent=31 // pred_check_branch
          %183 = sbr.rel (%p181) target = $region36
        $region35: #{tpu_custom_call.1} parent=31 // pred_region
          %s184 = smul.u32 8, %s14
          %p185 = scmp.lt.s32.totalorder %s184, 15
          %s186 = scalar_select %p185, %s184, 15
          %s187 = smul.addr %s186, 8
          %s188 = scalar_lea.vmem %s0, %s187
          %s189 = smul.u32 8, %s14
        $region36: #{tpu_custom_call.1} parent=31 // pred_fallthru
          _
      $region32: #{tpu_custom_call.1} parent=5 // pred_fallthru
        _
      %p190 = scmp.le.s32.totalorder 1, %s14
      %p191 = scmp.lt.s32.totalorder %s14, 3
      %p192 = pnand %p190, %p191
      %p193 = pneg %p192
      // Predicated region
      $region37: #{tpu_custom_call.1} parent=5 // pred_check
        _
      $region38: #{tpu_custom_call.1} parent=5 // pred_check_branch
        %195 = sbr.rel (%p192) target = $region40
      $region39: #{tpu_custom_call.1} parent=5 // pred_region
        %s196 = ssub.s32 %s14, 1
        %s197 = smul.u32 8, %s19
        %p198 = scmp.lt.s32.totalorder %s197, 15
        %s199 = scalar_select %p198, %s197, 15
        %s200 = smul.addr %s199, 8
        %s201 = scalar_lea.vmem %s0, %s200
        %p202 = pneg %p40
        %p203 = pneg %p37
        %p204 = pneg %p61
        %p205 = pneg %p58
        %p206 = pneg %p82
        %p207 = pneg %p79
        %p208 = pneg %p103
        %p209 = pneg %p100
        %p210 = pneg %p124
        %p211 = pneg %p121
        %p212 = pneg %p150
        %p213 = pneg %p147
        %s214 = sand.u32 %s137, 1
        %s215 = scalar_lea.sflag [#allocation3], %s214
        %s216 = sand.u32 %s137, 1
        %s217 = smul.addr %s216, 64
        %s218 = scalar_lea.vmem [#allocation2], %s217
        %s219 = smul.u32 8, %s19
        %p220 = scmp.lt.s32.totalorder %s219, 15
        %s221 = scalar_select %p220, %s219, 15
        %s222 = smul.addr %s221, 8
        %s223 = scalar_lea.vmem %s0, %s222
        %s224 = smul.u32 8, %s19
        %s225 = smul.u32 8, %s19
        %v226 = vld [vmem:[%s223] sm:$0xff]
        %v227 = vld [vmem:[%s223 + $0x8] sm:$0xff]
        %v228 = vld [vmem:[%s223 + $0x10] sm:$0xff]
        %v229 = vld [vmem:[%s223 + $0x18] sm:$0xff]
        %v230 = vld [vmem:[%s223 + $0x20] sm:$0xff]
        %v231 = vld [vmem:[%s223 + $0x28] sm:$0xff]
        %v232 = vld [vmem:[%s223 + $0x30] sm:$0xff]
        %v233 = vld [vmem:[%s223 + $0x38] sm:$0xff]
        %vm234 = vcmask 261120
        %v235 = vsel %vm234, %v226, 0.0
        %236 = vadd.xlane.f32.xlu0 %v235
        %v237 = vpop.xlane.xlu0 %236
        %v238 = vsel %vm234, %v227, 0.0
        %239 = vadd.xlane.f32.xlu0 %v238
        %v240 = vpop.xlane.xlu0 %239
        %v241 = vsel %vm234, %v228, 0.0
        %242 = vadd.xlane.f32.xlu0 %v241
        %v243 = vpop.xlane.xlu0 %242
        %v244 = vsel %vm234, %v229, 0.0
        %245 = vadd.xlane.f32.xlu0 %v244
        %v246 = vpop.xlane.xlu0 %245
        %v247 = vsel %vm234, %v230, 0.0
        %248 = vadd.xlane.f32.xlu0 %v247
        %v249 = vpop.xlane.xlu0 %248
        %v250 = vsel %vm234, %v231, 0.0
        %251 = vadd.xlane.f32.xlu0 %v250
        %v252 = vpop.xlane.xlu0 %251
        %v253 = vsel %vm234, %v232, 0.0
        %254 = vadd.xlane.f32.xlu0 %v253
        %v255 = vpop.xlane.xlu0 %254
        %v256 = vsel %vm234, %v233, 0.0
        %257 = vadd.xlane.f32.xlu0 %v256
        %v258 = vpop.xlane.xlu0 %257
        %v259 = vrcp.pop 32.0
        %v260 = vmul.f32 32.0, %v259
        %v261 = vsub.f32 1.0, %v260
        %v262 = vmul.f32 %v259, %v261
        %v263 = vadd.f32 %v259, %v262
        %vm264 = vweird.f32 %v259
        %v265 = vsel %vm264, %v259, %v263
        %v266 = vmul.f32 %v237, %v265
        %v267 = vmul.f32 %v240, %v265
        %v268 = vmul.f32 %v243, %v265
        %v269 = vmul.f32 %v246, %v265
        %v270 = vmul.f32 %v249, %v265
        %v271 = vmul.f32 %v252, %v265
        %v272 = vmul.f32 %v255, %v265
        %v273 = vmul.f32 %v258, %v265
        %v274 = vsub.f32 %v226, %v266
        %v275 = vsub.f32 %v227, %v267
        %v276 = vsub.f32 %v228, %v268
        %v277 = vsub.f32 %v229, %v269
        %v278 = vsub.f32 %v230, %v270
        %v279 = vsub.f32 %v231, %v271
        %v280 = vsub.f32 %v232, %v272
        %v281 = vsub.f32 %v233, %v273
        %v282 = vmul.f32 %v274, %v274
        %v283 = vmul.f32 %v275, %v275
        %v284 = vmul.f32 %v276, %v276
        %v285 = vmul.f32 %v277, %v277
        %v286 = vmul.f32 %v278, %v278
        %v287 = vmul.f32 %v279, %v279
        %v288 = vmul.f32 %v280, %v280
        %v289 = vmul.f32 %v281, %v281
        %v290 = vsel %vm234, %v282, 0.0
        %291 = vadd.xlane.f32.xlu0 %v290
        %v292 = vpop.xlane.xlu0 %291
        %v293 = vsel %vm234, %v283, 0.0
        %294 = vadd.xlane.f32.xlu0 %v293
        %v295 = vpop.xlane.xlu0 %294
        %v296 = vsel %vm234, %v284, 0.0
        %297 = vadd.xlane.f32.xlu0 %v296
        %v298 = vpop.xlane.xlu0 %297
        %v299 = vsel %vm234, %v285, 0.0
        %300 = vadd.xlane.f32.xlu0 %v299
        %v301 = vpop.xlane.xlu0 %300
        %v302 = vsel %vm234, %v286, 0.0
        %303 = vadd.xlane.f32.xlu0 %v302
        %v304 = vpop.xlane.xlu0 %303
        %v305 = vsel %vm234, %v287, 0.0
        %306 = vadd.xlane.f32.xlu0 %v305
        %v307 = vpop.xlane.xlu0 %306
        %v308 = vsel %vm234, %v288, 0.0
        %309 = vadd.xlane.f32.xlu0 %v308
        %v310 = vpop.xlane.xlu0 %309
        %v311 = vsel %vm234, %v289, 0.0
        %312 = vadd.xlane.f32.xlu0 %v311
        %v313 = vpop.xlane.xlu0 %312
        %v314 = vmul.f32 %v292, %v265
        %v315 = vmul.f32 %v295, %v265
        %v316 = vmul.f32 %v298, %v265
        %v317 = vmul.f32 %v301, %v265
        %v318 = vmul.f32 %v304, %v265
        %v319 = vmul.f32 %v307, %v265
        %v320 = vmul.f32 %v310, %v265
        %v321 = vmul.f32 %v313, %v265
        %v322 = vadd.f32 %v314, 1e-12
        %v323 = vadd.f32 %v315, 1e-12
        %v324 = vadd.f32 %v316, 1e-12
        %v325 = vadd.f32 %v317, 1e-12
        %v326 = vadd.f32 %v318, 1e-12
        %v327 = vadd.f32 %v319, 1e-12
        %v328 = vadd.f32 %v320, 1e-12
        %v329 = vadd.f32 %v321, 1e-12
        %v330 = vrsqrt.pop %v322
        %v331 = vmul.f32 %v330, %v322
        %v332 = vmul.f32 %v331, %v330
        %v333 = vmul.f32 0.5, %v332
        %v334 = vsub.f32 1.5, %v333
        %v335 = vmul.f32 %v330, %v334
        %vm336 = vweird.f32 %v322
        %vm337 = vweird.f32 %v330
        %vm338 = vmor %vm336, %vm337
        %v339 = vsel %vm338, %v330, %v335
        %v340 = vrsqrt.pop %v323
        %v341 = vmul.f32 %v340, %v323
        %v342 = vmul.f32 %v341, %v340
        %v343 = vmul.f32 0.5, %v342
        %v344 = vsub.f32 1.5, %v343
        %v345 = vmul.f32 %v340, %v344
        %vm346 = vweird.f32 %v323
        %vm347 = vweird.f32 %v340
        %vm348 = vmor %vm346, %vm347
        %v349 = vsel %vm348, %v340, %v345
        %v350 = vrsqrt.pop %v324
        %v351 = vmul.f32 %v350, %v324
        %v352 = vmul.f32 %v351, %v350
        %v353 = vmul.f32 0.5, %v352
        %v354 = vsub.f32 1.5, %v353
        %v355 = vmul.f32 %v350, %v354
        %vm356 = vweird.f32 %v324
        %vm357 = vweird.f32 %v350
        %vm358 = vmor %vm356, %vm357
        %v359 = vsel %vm358, %v350, %v355
        %v360 = vrsqrt.pop %v325
        %v361 = vmul.f32 %v360, %v325
        %v362 = vmul.f32 %v361, %v360
        %v363 = vmul.f32 0.5, %v362
        %v364 = vsub.f32 1.5, %v363
        %v365 = vmul.f32 %v360, %v364
        %vm366 = vweird.f32 %v325
        %vm367 = vweird.f32 %v360
        %vm368 = vmor %vm366, %vm367
        %v369 = vsel %vm368, %v360, %v365
        %v370 = vrsqrt.pop %v326
        %v371 = vmul.f32 %v370, %v326
        %v372 = vmul.f32 %v371, %v370
        %v373 = vmul.f32 0.5, %v372
        %v374 = vsub.f32 1.5, %v373
        %v375 = vmul.f32 %v370, %v374
        %vm376 = vweird.f32 %v326
        %vm377 = vweird.f32 %v370
        %vm378 = vmor %vm376, %vm377
        %v379 = vsel %vm378, %v370, %v375
        %v380 = vrsqrt.pop %v327
        %v381 = vmul.f32 %v380, %v327
        %v382 = vmul.f32 %v381, %v380
        %v383 = vmul.f32 0.5, %v382
        %v384 = vsub.f32 1.5, %v383
        %v385 = vmul.f32 %v380, %v384
        %vm386 = vweird.f32 %v327
        %vm387 = vweird.f32 %v380
        %vm388 = vmor %vm386, %vm387
        %v389 = vsel %vm388, %v380, %v385
        %v390 = vrsqrt.pop %v328
        %v391 = vmul.f32 %v390, %v328
        %v392 = vmul.f32 %v391, %v390
        %v393 = vmul.f32 0.5, %v392
        %v394 = vsub.f32 1.5, %v393
        %v395 = vmul.f32 %v390, %v394
        %vm396 = vweird.f32 %v328
        %vm397 = vweird.f32 %v390
        %vm398 = vmor %vm396, %vm397
        %v399 = vsel %vm398, %v390, %v395
        %v400 = vrsqrt.pop %v329
        %v401 = vmul.f32 %v400, %v329
        %v402 = vmul.f32 %v401, %v400
        %v403 = vmul.f32 0.5, %v402
        %v404 = vsub.f32 1.5, %v403
        %v405 = vmul.f32 %v400, %v404
        %vm406 = vweird.f32 %v329
        %vm407 = vweird.f32 %v400
        %vm408 = vmor %vm406, %vm407
        %v409 = vsel %vm408, %v400, %v405
        %v410 = vmul.f32 %v274, %v339
        %v411 = vmul.f32 %v275, %v349
        %v412 = vmul.f32 %v276, %v359
        %v413 = vmul.f32 %v277, %v369
        %v414 = vmul.f32 %v278, %v379
        %v415 = vmul.f32 %v279, %v389
        %v416 = vmul.f32 %v280, %v399
        %v417 = vmul.f32 %v281, %v409
        %v418 = vld [vmem:[%s1] sm:$0x1]
        %v420 = vperm.slane %v418, 0
        %v422 = vmul.f32 %v410, %v420
        %v423 = vmul.f32 %v411, %v420
        %v424 = vmul.f32 %v412, %v420
        %v425 = vmul.f32 %v413, %v420
        %v426 = vmul.f32 %v414, %v420
        %v427 = vmul.f32 %v415, %v420
        %v428 = vmul.f32 %v416, %v420
        %v429 = vmul.f32 %v417, %v420
        %v430 = vld [vmem:[%s2] sm:$0x1]
        %v432 = vperm.slane %v430, 0
        %v434 = vadd.f32 %v422, %v432
        %v435 = vadd.f32 %v423, %v432
        %v436 = vadd.f32 %v424, %v432
        %v437 = vadd.f32 %v425, %v432
        %v438 = vadd.f32 %v426, %v432
        %v439 = vadd.f32 %v427, %v432
        %v440 = vadd.f32 %v428, %v432
        %v441 = vadd.f32 %v429, %v432
        %v442 = vld [vmem:[%s3] sm:$0xff]
        %v443 = vld [vmem:[%s3 + $0x8] sm:$0xff]
        %v444 = vld [vmem:[%s3 + $0x10] sm:$0xff]
        %v445 = vld [vmem:[%s3 + $0x18] sm:$0xff]
        %v446 = vld [vmem:[%s4] sm:$0x1]
        %v448 = vperm.slane %v446, 0
        %v451 = vsel %vm234, %v434, 0
        %v454 = vsel %vm234, %v435, 0
        %v457 = vsel %vm234, %v436, 0
        %v460 = vsel %vm234, %v437, 0
        %v463 = vsel %vm234, %v438, 0
        %v466 = vsel %vm234, %v439, 0
        %v469 = vsel %vm234, %v440, 0
        %v472 = vsel %vm234, %v441, 0
        %474 = vmatpush.msra.mxu0 0.0
        %475 = vmatpush.msra.mxu0 0.0
        %476 = vmatpush.msra.mxu0 0.0
        %477 = vmatpush.msra.mxu0 0.0
        %478 = vmatpush.msra.mxu0 0.0
        %479 = vmatpush.msra.mxu0 0.0
        %480 = vmatpush.msra.mxu0 0.0
        %481 = vmatpush.msra.mxu0 0.0
        %482 = vmatpush.msra.mxu0 0.0
        %483 = vmatpush.msra.mxu0 0.0
        %484 = vmatpush.msra.mxu0 0.0
        %485 = vmatpush.msra.mxu0 0.0
        %486 = vmatpush.msra.mxu0 %v445
        %487 = vmatpush.msra.mxu0 %v444
        %488 = vmatpush.msra.mxu0 %v443
        %489 = vmatpush.msra.mxu0 %v442
        %490 = vmatmul.f32.gmra.mxu0 %v451
        %v491 = vpop.f32.mrf.mxu0
        %v492 = vadd.f32 %v448, %v491
        %493 = vmatmul.f32.gmra.mxu0 %v454
        %v494 = vpop.f32.mrf.mxu0
        %v495 = vadd.f32 %v448, %v494
        %496 = vmatmul.f32.gmra.mxu0 %v457
        %v497 = vpop.f32.mrf.mxu0
        %v498 = vadd.f32 %v448, %v497
        %499 = vmatmul.f32.gmra.mxu0 %v460
        %v500 = vpop.f32.mrf.mxu0
        %v501 = vadd.f32 %v448, %v500
        %502 = vmatmul.f32.gmra.mxu0 %v463
        %v503 = vpop.f32.mrf.mxu0
        %v504 = vadd.f32 %v448, %v503
        %505 = vmatmul.f32.gmra.mxu0 %v466
        %v506 = vpop.f32.mrf.mxu0
        %v507 = vadd.f32 %v448, %v506
        %508 = vmatmul.f32.gmra.mxu0 %v469
        %v509 = vpop.f32.mrf.mxu0
        %v510 = vadd.f32 %v448, %v509
        %511 = vmatmul.f32.gmra.mxu0 %v472
        %v512 = vpop.f32.mrf.mxu0
        %v513 = vadd.f32 %v448, %v512
        %514 = vdwg.mxu0
        %v515 = vmul.f32 %v492, 0.5
        %v516 = vmul.f32 %v495, 0.5
        %v517 = vmul.f32 %v498, 0.5
        %v518 = vmul.f32 %v501, 0.5
        %v519 = vmul.f32 %v504, 0.5
        %v520 = vmul.f32 %v507, 0.5
        %v521 = vmul.f32 %v510, 0.5
        %v522 = vmul.f32 %v513, 0.5
        %v523 = vmul.f32 %v492, 0.70710677
        %v524 = vmul.f32 %v495, 0.70710677
        %v525 = vmul.f32 %v498, 0.70710677
        %v526 = vmul.f32 %v501, 0.70710677
        %v527 = vmul.f32 %v504, 0.70710677
        %v528 = vmul.f32 %v507, 0.70710677
        %v529 = vmul.f32 %v510, 0.70710677
        %v530 = vmul.f32 %v513, 0.70710677
        %v531 = vand.u32 2147483647, %v523
        %v532 = vand.u32 2147483647, %v524
        %v533 = vand.u32 2147483647, %v525
        %v534 = vand.u32 2147483647, %v526
        %v535 = vand.u32 2147483647, %v527
        %v536 = vand.u32 2147483647, %v528
        %v537 = vand.u32 2147483647, %v529
        %v538 = vand.u32 2147483647, %v530
        %v539 = vmul.f32 %v531, 0.3275911
        %v540 = vmul.f32 %v532, 0.3275911
        %v541 = vmul.f32 %v533, 0.3275911
        %v542 = vmul.f32 %v534, 0.3275911
        %v543 = vmul.f32 %v535, 0.3275911
        %v544 = vmul.f32 %v536, 0.3275911
        %v545 = vmul.f32 %v537, 0.3275911
        %v546 = vmul.f32 %v538, 0.3275911
        %v547 = vadd.f32 %v539, 1.0
        %v548 = vadd.f32 %v540, 1.0
        %v549 = vadd.f32 %v541, 1.0
        %v550 = vadd.f32 %v542, 1.0
        %v551 = vadd.f32 %v543, 1.0
        %v552 = vadd.f32 %v544, 1.0
        %v553 = vadd.f32 %v545, 1.0
        %v554 = vadd.f32 %v546, 1.0
        %v555 = vrcp.pop %v547
        %v556 = vrcp.pop %v548
        %v557 = vrcp.pop %v549
        %v558 = vrcp.pop %v550
        %v559 = vrcp.pop %v551
        %v560 = vrcp.pop %v552
        %v561 = vrcp.pop %v553
        %v562 = vrcp.pop %v554
        %v563 = vmul.f32 %v547, %v555
        %v564 = vmul.f32 %v548, %v556
        %v565 = vmul.f32 %v549, %v557
        %v566 = vmul.f32 %v550, %v558
        %v567 = vmul.f32 %v551, %v559
        %v568 = vmul.f32 %v552, %v560
        %v569 = vmul.f32 %v553, %v561
        %v570 = vmul.f32 %v554, %v562
        %v571 = vsub.f32 2.0, %v563
        %v572 = vsub.f32 2.0, %v564
        %v573 = vsub.f32 2.0, %v565
        %v574 = vsub.f32 2.0, %v566
        %v575 = vsub.f32 2.0, %v567
        %v576 = vsub.f32 2.0, %v568
        %v577 = vsub.f32 2.0, %v569
        %v578 = vsub.f32 2.0, %v570
        %v579 = vmul.f32 %v555, %v571
        %v580 = vmul.f32 %v556, %v572
        %v581 = vmul.f32 %v557, %v573
        %v582 = vmul.f32 %v558, %v574
        %v583 = vmul.f32 %v559, %v575
        %v584 = vmul.f32 %v560, %v576
        %v585 = vmul.f32 %v561, %v577
        %v586 = vmul.f32 %v562, %v578
        %v587 = vmul.f32 %v579, 1.0614054
        %v588 = vmul.f32 %v580, 1.0614054
        %v589 = vmul.f32 %v581, 1.0614054
        %v590 = vmul.f32 %v582, 1.0614054
        %v591 = vmul.f32 %v583, 1.0614054
        %v592 = vmul.f32 %v584, 1.0614054
        %v593 = vmul.f32 %v585, 1.0614054
        %v594 = vmul.f32 %v586, 1.0614054
        %v595 = vadd.f32 %v587, -1.4531521
        %v596 = vadd.f32 %v588, -1.4531521
        %v597 = vadd.f32 %v589, -1.4531521
        %v598 = vadd.f32 %v590, -1.4531521
        %v599 = vadd.f32 %v591, -1.4531521
        %v600 = vadd.f32 %v592, -1.4531521
        %v601 = vadd.f32 %v593, -1.4531521
        %v602 = vadd.f32 %v594, -1.4531521
        %v603 = vmul.f32 %v595, %v579
        %v604 = vmul.f32 %v596, %v580
        %v605 = vmul.f32 %v597, %v581
        %v606 = vmul.f32 %v598, %v582
        %v607 = vmul.f32 %v599, %v583
        %v608 = vmul.f32 %v600, %v584
        %v609 = vmul.f32 %v601, %v585
        %v610 = vmul.f32 %v602, %v586
        %v611 = vadd.f32 %v603, 1.4214138
        %v612 = vadd.f32 %v604, 1.4214138
        %v613 = vadd.f32 %v605, 1.4214138
        %v614 = vadd.f32 %v606, 1.4214138
        %v615 = vadd.f32 %v607, 1.4214138
        %v616 = vadd.f32 %v608, 1.4214138
        %v617 = vadd.f32 %v609, 1.4214138
        %v618 = vadd.f32 %v610, 1.4214138
        %v619 = vmul.f32 %v611, %v579
        %v620 = vmul.f32 %v612, %v580
        %v621 = vmul.f32 %v613, %v581
        %v622 = vmul.f32 %v614, %v582
        %v623 = vmul.f32 %v615, %v583
        %v624 = vmul.f32 %v616, %v584
        %v625 = vmul.f32 %v617, %v585
        %v626 = vmul.f32 %v618, %v586
        %v627 = vadd.f32 %v619, -0.28449672
        %v628 = vadd.f32 %v620, -0.28449672
        %v629 = vadd.f32 %v621, -0.28449672
        %v630 = vadd.f32 %v622, -0.28449672
        %v631 = vadd.f32 %v623, -0.28449672
        %v632 = vadd.f32 %v624, -0.28449672
        %v633 = vadd.f32 %v625, -0.28449672
        %v634 = vadd.f32 %v626, -0.28449672
        %v635 = vmul.f32 %v627, %v579
        %v636 = vmul.f32 %v628, %v580
        %v637 = vmul.f32 %v629, %v581
        %v638 = vmul.f32 %v630, %v582
        %v639 = vmul.f32 %v631, %v583
        %v640 = vmul.f32 %v632, %v584
        %v641 = vmul.f32 %v633, %v585
        %v642 = vmul.f32 %v634, %v586
        %v643 = vadd.f32 %v635, 0.2548296
        %v644 = vadd.f32 %v636, 0.2548296
        %v645 = vadd.f32 %v637, 0.2548296
        %v646 = vadd.f32 %v638, 0.2548296
        %v647 = vadd.f32 %v639, 0.2548296
        %v648 = vadd.f32 %v640, 0.2548296
        %v649 = vadd.f32 %v641, 0.2548296
        %v650 = vadd.f32 %v642, 0.2548296
        %v651 = vmul.f32 %v643, %v579
        %v652 = vmul.f32 %v644, %v580
        %v653 = vmul.f32 %v645, %v581
        %v654 = vmul.f32 %v646, %v582
        %v655 = vmul.f32 %v647, %v583
        %v656 = vmul.f32 %v648, %v584
        %v657 = vmul.f32 %v649, %v585
        %v658 = vmul.f32 %v650, %v586
        %v659 = vmul.f32 %v531, %v531
        %v660 = vmul.f32 %v532, %v532
        %v661 = vmul.f32 %v533, %v533
        %v662 = vmul.f32 %v534, %v534
        %v663 = vmul.f32 %v535, %v535
        %v664 = vmul.f32 %v536, %v536
        %v665 = vmul.f32 %v537, %v537
        %v666 = vmul.f32 %v538, %v538
        %v667 = vsub.f32 0.0, %v659
        %v668 = vsub.f32 0.0, %v660
        %v669 = vsub.f32 0.0, %v661
        %v670 = vsub.f32 0.0, %v662
        %v671 = vsub.f32 0.0, %v663
        %v672 = vsub.f32 0.0, %v664
        %v673 = vsub.f32 0.0, %v665
        %v674 = vsub.f32 0.0, %v666
        %v675 = vmul.f32 %v667, 1.442695
        %v676 = vpow.pop %v675
        %v677 = vmul.f32 %v668, 1.442695
        %v678 = vpow.pop %v677
        %v679 = vmul.f32 %v669, 1.442695
        %v680 = vpow.pop %v679
        %v681 = vmul.f32 %v670, 1.442695
        %v682 = vpow.pop %v681
        %v683 = vmul.f32 %v671, 1.442695
        %v684 = vpow.pop %v683
        %v685 = vmul.f32 %v672, 1.442695
        %v686 = vpow.pop %v685
        %v687 = vmul.f32 %v673, 1.442695
        %v688 = vpow.pop %v687
        %v689 = vmul.f32 %v674, 1.442695
        %v690 = vpow.pop %v689
        %v691 = vmul.f32 %v651, %v676
        %v692 = vmul.f32 %v652, %v678
        %v693 = vmul.f32 %v653, %v680
        %v694 = vmul.f32 %v654, %v682
        %v695 = vmul.f32 %v655, %v684
        %v696 = vmul.f32 %v656, %v686
        %v697 = vmul.f32 %v657, %v688
        %v698 = vmul.f32 %v658, %v690
        %v699 = vsub.f32 1.0, %v691
        %v700 = vsub.f32 1.0, %v692
        %v701 = vsub.f32 1.0, %v693
        %v702 = vsub.f32 1.0, %v694
        %v703 = vsub.f32 1.0, %v695
        %v704 = vsub.f32 1.0, %v696
        %v705 = vsub.f32 1.0, %v697
        %v706 = vsub.f32 1.0, %v698
        %vm707 = vcmp.ge.f32.partialorder %v523, 0.0
        %vm708 = vcmp.ge.f32.partialorder %v524, 0.0
        %vm709 = vcmp.ge.f32.partialorder %v525, 0.0
        %vm710 = vcmp.ge.f32.partialorder %v526, 0.0
        %vm711 = vcmp.ge.f32.partialorder %v527, 0.0
        %vm712 = vcmp.ge.f32.partialorder %v528, 0.0
        %vm713 = vcmp.ge.f32.partialorder %v529, 0.0
        %vm714 = vcmp.ge.f32.partialorder %v530, 0.0
        %v715 = vsub.f32 0.0, %v699
        %v716 = vsub.f32 0.0, %v700
        %v717 = vsub.f32 0.0, %v701
        %v718 = vsub.f32 0.0, %v702
        %v719 = vsub.f32 0.0, %v703
        %v720 = vsub.f32 0.0, %v704
        %v721 = vsub.f32 0.0, %v705
        %v722 = vsub.f32 0.0, %v706
        %v723 = vsel %vm707, %v699, %v715
        %v724 = vsel %vm708, %v700, %v716
        %v725 = vsel %vm709, %v701, %v717
        %v726 = vsel %vm710, %v702, %v718
        %v727 = vsel %vm711, %v703, %v719
        %v728 = vsel %vm712, %v704, %v720
        %v729 = vsel %vm713, %v705, %v721
        %v730 = vsel %vm714, %v706, %v722
        %v731 = vadd.f32 %v723, 1.0
        %v732 = vadd.f32 %v724, 1.0
        %v733 = vadd.f32 %v725, 1.0
        %v734 = vadd.f32 %v726, 1.0
        %v735 = vadd.f32 %v727, 1.0
        %v736 = vadd.f32 %v728, 1.0
        %v737 = vadd.f32 %v729, 1.0
        %v738 = vadd.f32 %v730, 1.0
        %v739 = vmul.f32 %v515, %v731
        %v740 = vmul.f32 %v516, %v732
        %v741 = vmul.f32 %v517, %v733
        %v742 = vmul.f32 %v518, %v734
        %v743 = vmul.f32 %v519, %v735
        %v744 = vmul.f32 %v520, %v736
        %v745 = vmul.f32 %v521, %v737
        %v746 = vmul.f32 %v522, %v738
        %747 = vst [vmem:[%s218] sm:$0xff] %v739
        %748 = vst [vmem:[%s218 + $0x8] sm:$0xff] %v740
        %749 = vst [vmem:[%s218 + $0x10] sm:$0xff] %v741
        %750 = vst [vmem:[%s218 + $0x18] sm:$0xff] %v742
        %751 = vst [vmem:[%s218 + $0x20] sm:$0xff] %v743
        %752 = vst [vmem:[%s218 + $0x28] sm:$0xff] %v744
        %753 = vst [vmem:[%s218 + $0x30] sm:$0xff] %v745
        %754 = vst [vmem:[%s218 + $0x38] sm:$0xff] %v746
        %s755 = sand.u32 %s137, 1
        %s756 = scalar_lea.sflag [#allocation3], %s755
        %s757 = sand.u32 %s137, 1
        %s758 = smul.addr %s757, 64
        %s759 = scalar_lea.vmem [#allocation2], %s758
        // Predicated region
        $region41: #{tpu_custom_call.1} parent=39 // pred_check
          %p760 = pneg %p147
        $region42: #{tpu_custom_call.1} parent=39 // pred_check_branch
          %762 = sbr.rel (%p760) target = $region44
        $region43: #{tpu_custom_call.1} parent=39 // pred_region
          %s763 = smul.u32 8, %s19
          %765 = vsyncadd %s756, 0
          %s766 = smul.addr %s763, 8
          %s767 = scalar_lea.hbm %s5, %s766
          %s768 = sshll.u32 %s759, 4
          %s769 = int_to_ptr.vmem [resolvable:$true] %s768
          %s770 = sshll.u32 %s767, 4
          %s771 = int_to_ptr.hbm [resolvable:$true] %s770
          %776 = dma.vmem_to_hbm [thread:$0]  %s769, 1024, %s771, %s756, 128, 128, 8
        $region44: #{tpu_custom_call.1} parent=39 // pred_fallthru
          _
      $region40: #{tpu_custom_call.1} parent=5 // pred_fallthru
        _
      %p777 = scmp.le.s32.totalorder 2, %s14
      // Predicated region
      $region45: #{tpu_custom_call.1} parent=5 // pred_check
        %p778 = pneg %p777
      $region46: #{tpu_custom_call.1} parent=5 // pred_check_branch
        %780 = sbr.rel (%p778) target = $region48
      $region47: #{tpu_custom_call.1} parent=5 // pred_region
        %s781 = ssub.s32 %s14, 2
        // Predicated region
        $region49: #{tpu_custom_call.1} parent=47 // pred_check
          %p782 = pneg %p153
        $region50: #{tpu_custom_call.1} parent=47 // pred_check_branch
          %784 = sbr.rel (%p782) target = $region52
        $region51: #{tpu_custom_call.1} parent=47 // pred_region
          %s785 = sand.u32 %s138, 1
          %s786 = scalar_lea.sflag [#allocation3], %s785
          %s787 = sand.u32 %s138, 1
          %s788 = smul.addr %s787, 64
          %s789 = scalar_lea.vmem [#allocation2], %s788
          %791 = dma.done %s786, 1024
        $region52: #{tpu_custom_call.1} parent=47 // pred_fallthru
          _
      $region48: #{tpu_custom_call.1} parent=5 // pred_fallthru
        _
    $region6: #{tpu_custom_call.1} parent=1 // loop_footer
      %s18 = sadd.s32 1, %s14
    $region7: #{tpu_custom_call.1} parent=1 // loop_footer_branch
      %13 = sbr.rel target = $region3
    $region8: #{tpu_custom_call.1} parent=1 // loop_exit
      _
    %792 = vsyncpa [#allocation3], 1
    %s793 = scalar_lea.sflag [#allocation3], 1
    %794 = vsyncpa %s793, 1

</llo_original>
